<compile_context>
chip_gen: v5e
topology: v5e:2x2
jax: 0.10.0
libtpu: 0.0.40
codegen_flags: <defaults>
</compile_context>

<pallas_src>
import functools

import jax
import jax.numpy as jnp
from jax import lax
from jax.experimental import pallas as pl
from jax.experimental.pallas import tpu as pltpu

LANE = 128     # TPU lane width (last-dim tiling unit, f32)
SUBLANE = 8    # f32 sublane width (second-to-last dim tiling unit)


def _round_up(n: int, m: int) -> int:
    return ((n + m - 1) // m) * m


def _pad_axis(a, target: int, axis: int):
    pad = target - a.shape[axis]
    if pad == 0:
        return a
    widths = [(0, 0)] * a.ndim
    widths[axis] = (0, pad)
    return jnp.pad(a, widths)


def mlp_pure_kernel(x_ref, w1_ref, b1_ref, w2_ref, b2_ref, w3_ref, b3_ref,
                    o_ref, *, hidden_nblocks: int):
    """fc1 -> relu -> (fc2 -> relu) * hidden_nblocks -> fc3, fused in VMEM.

    One batch tile per grid step; all three weight sets stay resident in VMEM
    (index_map returns (0, 0) for every grid step).
    """
    x = x_ref[...]
    tm = x.shape[0]
    hidden = w1_ref.shape[1]

    # fc1 + ReLU
    h = jnp.dot(x, w1_ref[...], preferred_element_type=jnp.float32) + b1_ref[...]
    h = jnp.maximum(h, 0.0)

    # Shared fc2 block applied hidden_nblocks times.
    # Hoist the bias broadcast (JAX does not CSE broadcast_in_dim per-iter).
    w2 = w2_ref[...]
    b2b = jnp.broadcast_to(b2_ref[...], (tm, hidden))

    def fc2_block(_, h):
        h = jnp.dot(h, w2, preferred_element_type=jnp.float32) + b2b
        return jnp.maximum(h, 0.0)

    h = lax.fori_loop(0, hidden_nblocks, fc2_block, h, unroll=True)

    # fc3 (no activation, no softmax — matches forward(); self.end is unused)
    out = jnp.dot(h, w3_ref[...], preferred_element_type=jnp.float32) + b3_ref[...]
    o_ref[...] = out.astype(o_ref.dtype)


def mlp_pure_forward(x, params, hidden_nblocks, *, tm=None):
    """x: (B, input_size) f32. params: dict of transposed weights + (1, out) biases."""
    batch, in_size = x.shape
    hidden = params["w1"].shape[1]
    out_size = params["w3"].shape[1]

    # Lane-dense padded feature sizes (exact: zero-padded units stay 0).
    in_p = _round_up(in_size, LANE)
    hid_p = _round_up(hidden, LANE)
    out_p = _round_up(out_size, LANE)

    # Batch tile: multiple of the f32 sublane, 128 rows when batch allows.
    if tm is None:
        tm = LANE if batch >= LANE else _round_up(batch, SUBLANE)
    batch_p = _round_up(batch, tm)
    grid = (batch_p // tm,)

    # Zero-pad operands to the lane-dense slab shapes.
    xp = _pad_axis(_pad_axis(x, batch_p, 0), in_p, 1)
    w1 = _pad_axis(_pad_axis(params["w1"], in_p, 0), hid_p, 1)
    b1 = _pad_axis(params["b1"], hid_p, 1)
    w2 = _pad_axis(_pad_axis(params["w2"], hid_p, 0), hid_p, 1)
    b2 = _pad_axis(params["b2"], hid_p, 1)
    w3 = _pad_axis(_pad_axis(params["w3"], hid_p, 0), out_p, 1)
    b3 = _pad_axis(params["b3"], out_p, 1)

    # Activations stream per batch tile; weights resident across the grid.
    x_spec = pl.BlockSpec((tm, in_p), lambda i: (i, 0))
    out_spec = pl.BlockSpec((tm, out_p), lambda i: (i, 0))

    def resident(shape):
        return pl.BlockSpec(shape, lambda i: (0, 0))

    kernel = functools.partial(mlp_pure_kernel, hidden_nblocks=hidden_nblocks)

    out_pad = pl.pallas_call(
        kernel,
        out_shape=jax.ShapeDtypeStruct((batch_p, out_p), jnp.float32),
        grid=grid,
        in_specs=[
            x_spec,
            resident((in_p, hid_p)), resident((1, hid_p)),
            resident((hid_p, hid_p)), resident((1, hid_p)),
            resident((hid_p, out_p)), resident((1, out_p)),
        ],
        out_specs=out_spec,
        compiler_params=pltpu.CompilerParams(
            # Independent batch tiles -> megacore sharding on 2-TC chips (v7x).
            dimension_semantics=("parallel",),
            # Budget against the smallest VMEM target (v7x: 64 MiB phys / 32 MiB scoped).
            vmem_limit_bytes=32 * 1024 * 1024,
        ),
    )(xp, w1, b1, w2, b2, w3, b3)

    # Slice the lane-dense slab back to the logical output.
    return out_pad[:batch, :out_size]


def init_params(key, input_size, hidden_size, output_size):
    """Deterministic init mimicking PyTorch Linear default (U[-1/sqrt(fan_in), +])."""
    ks = jax.random.split(key, 6)

    def lin(kw, kb, fan_in, fan_out):
        bound = 1.0 / jnp.sqrt(fan_in)
        # stored already transposed: (in, out); bias as (1, out) for broadcast
        w = jax.random.uniform(kw, (fan_in, fan_out), jnp.float32, -bound, bound)
        b = jax.random.uniform(kb, (1, fan_out), jnp.float32, -bound, bound)
        return w, b

    w1, b1 = lin(ks[0], ks[1], input_size, hidden_size)
    w2, b2 = lin(ks[2], ks[3], hidden_size, hidden_size)
    w3, b3 = lin(ks[4], ks[5], hidden_size, output_size)
    return dict(w1=w1, b1=b1, w2=w2, b2=b2, w3=w3, b3=b3)


def reference_forward(x, p, hidden_nblocks):
    h = jnp.maximum(x @ p["w1"] + p["b1"], 0.0)
    for _ in range(hidden_nblocks):
        h = jnp.maximum(h @ p["w2"] + p["b2"], 0.0)
    return h @ p["w3"] + p["b3"]


if __name__ == "__main__":
    # meta_params = {'hidden_width': 32, 'hidden_nblocks': 2}
    input_size = 16
    hidden_size = 32
    output_size = 8
    hidden_nblocks = 2
    # batch chosen to exercise the batch grid (2 tiles of 128) and the
    # batch-padding path (200 is not a multiple of 128).
    batch = 200

    key = jax.random.PRNGKey(0)
    kx, kp = jax.random.split(key)
    x = jax.random.normal(kx, (batch, input_size), jnp.float32)
    params = init_params(kp, input_size, hidden_size, output_size)

    out = mlp_pure_forward(x, params, hidden_nblocks)
    out = jax.block_until_ready(out)

    ref = reference_forward(x, params, hidden_nblocks)
    assert out.shape == (batch, output_size)
    assert jnp.allclose(out, ref, atol=1e-4, rtol=1e-5), float(
        jnp.max(jnp.abs(out - ref)))

    print("KERNEL_OK")
</pallas_src>

<mosaic_0001>
module attributes {stable_mosaic.version = 11 : i64} {
  func.func @mlp_pure_kernel(%arg0: i32, %arg1: memref<128x128xf32, #tpu.memory_space<vmem>>, %arg2: memref<128x128xf32, #tpu.memory_space<vmem>>, %arg3: memref<1x128xf32, #tpu.memory_space<vmem>>, %arg4: memref<128x128xf32, #tpu.memory_space<vmem>>, %arg5: memref<1x128xf32, #tpu.memory_space<vmem>>, %arg6: memref<128x128xf32, #tpu.memory_space<vmem>>, %arg7: memref<1x128xf32, #tpu.memory_space<vmem>>, %arg8: memref<128x128xf32, #tpu.memory_space<vmem>>) attributes {dimension_semantics = [#tpu.dimension_semantics<parallel>], iteration_bounds = array<i64: 2>, scalar_prefetch = 0 : i64, scratch_operands = 0 : i64, tpu.core_type = #tpu.core_type<tc>, window_params = [{transform_indices = @transform_0, window_bounds = array<i64: 128, 128>}, {pipeline_mode = #tpu.pipeline_mode<synchronous>, transform_indices = @transform_1, window_bounds = array<i64: 128, 128>}, {pipeline_mode = #tpu.pipeline_mode<synchronous>, transform_indices = @transform_2, window_bounds = array<i64: 1, 128>}, {pipeline_mode = #tpu.pipeline_mode<synchronous>, transform_indices = @transform_3, window_bounds = array<i64: 128, 128>}, {pipeline_mode = #tpu.pipeline_mode<synchronous>, transform_indices = @transform_4, window_bounds = array<i64: 1, 128>}, {pipeline_mode = #tpu.pipeline_mode<synchronous>, transform_indices = @transform_5, window_bounds = array<i64: 128, 128>}, {pipeline_mode = #tpu.pipeline_mode<synchronous>, transform_indices = @transform_6, window_bounds = array<i64: 1, 128>}, {transform_indices = @transform_7, window_bounds = array<i64: 128, 128>}]} {
    %c0 = arith.constant 0 : index
    %c0_0 = arith.constant 0 : index
    %0 = vector.load %arg1[%c0, %c0_0] : memref<128x128xf32, #tpu.memory_space<vmem>>, vector<128x128xf32>
    %c0_1 = arith.constant 0 : index
    %c0_2 = arith.constant 0 : index
    %1 = vector.load %arg2[%c0_1, %c0_2] : memref<128x128xf32, #tpu.memory_space<vmem>>, vector<128x128xf32>
    %cst = arith.constant dense<0.000000e+00> : vector<128x128xf32>
    %2 = tpu.matmul %0, %1, %cst {dimension_numbers = #tpu.dot_dimension_numbers<[1], [0], [0], [1], [0, 0, 1, 1], [], []>} : vector<128x128xf32>, vector<128x128xf32>, vector<128x128xf32> -> vector<128x128xf32>
    %c0_3 = arith.constant 0 : index
    %c0_4 = arith.constant 0 : index
    %3 = vector.load %arg3[%c0_3, %c0_4] : memref<1x128xf32, #tpu.memory_space<vmem>>, vector<1x128xf32>
    %4 = vector.broadcast %3 : vector<1x128xf32> to vector<128x128xf32>
    %5 = arith.addf %2, %4 : vector<128x128xf32>
    %cst_5 = arith.constant 0.000000e+00 : f32
    %6 = vector.broadcast %cst_5 : f32 to vector<128x128xf32>
    %7 = arith.maximumf %5, %6 : vector<128x128xf32>
    %c0_6 = arith.constant 0 : index
    %c0_7 = arith.constant 0 : index
    %8 = vector.load %arg4[%c0_6, %c0_7] : memref<128x128xf32, #tpu.memory_space<vmem>>, vector<128x128xf32>
    %c0_8 = arith.constant 0 : index
    %c0_9 = arith.constant 0 : index
    %9 = vector.load %arg5[%c0_8, %c0_9] : memref<1x128xf32, #tpu.memory_space<vmem>>, vector<1x128xf32>
    %10 = vector.shape_cast %9 : vector<1x128xf32> to vector<1x128xf32>
    %11 = vector.broadcast %10 : vector<1x128xf32> to vector<128x128xf32>
    %c0_i32 = arith.constant 0 : i32
    %cst_10 = arith.constant dense<0.000000e+00> : vector<128x128xf32>
    %12 = tpu.matmul %7, %8, %cst_10 {dimension_numbers = #tpu.dot_dimension_numbers<[1], [0], [0], [1], [0, 0, 1, 1], [], []>} : vector<128x128xf32>, vector<128x128xf32>, vector<128x128xf32> -> vector<128x128xf32>
    %13 = arith.addf %12, %11 : vector<128x128xf32>
    %cst_11 = arith.constant 0.000000e+00 : f32
    %14 = vector.broadcast %cst_11 : f32 to vector<128x128xf32>
    %15 = arith.maximumf %13, %14 : vector<128x128xf32>
    %c1_i32 = arith.constant 1 : i32
    %cst_12 = arith.constant dense<0.000000e+00> : vector<128x128xf32>
    %16 = tpu.matmul %15, %8, %cst_12 {dimension_numbers = #tpu.dot_dimension_numbers<[1], [0], [0], [1], [0, 0, 1, 1], [], []>} : vector<128x128xf32>, vector<128x128xf32>, vector<128x128xf32> -> vector<128x128xf32>
    %17 = arith.addf %16, %11 : vector<128x128xf32>
    %cst_13 = arith.constant 0.000000e+00 : f32
    %18 = vector.broadcast %cst_13 : f32 to vector<128x128xf32>
    %19 = arith.maximumf %17, %18 : vector<128x128xf32>
    %c0_14 = arith.constant 0 : index
    %c0_15 = arith.constant 0 : index
    %20 = vector.load %arg6[%c0_14, %c0_15] : memref<128x128xf32, #tpu.memory_space<vmem>>, vector<128x128xf32>
    %cst_16 = arith.constant dense<0.000000e+00> : vector<128x128xf32>
    %21 = tpu.matmul %19, %20, %cst_16 {dimension_numbers = #tpu.dot_dimension_numbers<[1], [0], [0], [1], [0, 0, 1, 1], [], []>} : vector<128x128xf32>, vector<128x128xf32>, vector<128x128xf32> -> vector<128x128xf32>
    %c0_17 = arith.constant 0 : index
    %c0_18 = arith.constant 0 : index
    %22 = vector.load %arg7[%c0_17, %c0_18] : memref<1x128xf32, #tpu.memory_space<vmem>>, vector<1x128xf32>
    %23 = vector.broadcast %22 : vector<1x128xf32> to vector<128x128xf32>
    %24 = arith.addf %21, %23 : vector<128x128xf32>
    %c0_19 = arith.constant 0 : index
    %c0_20 = arith.constant 0 : index
    %25 = vector.load %arg8[%c0_19, %c0_20] : memref<128x128xf32, #tpu.memory_space<vmem>>, vector<128x128xf32>
    tpu.vector_store %arg8[%c0_19, %c0_20], %24 {strides = array<i32>} : memref<128x128xf32, #tpu.memory_space<vmem>>, vector<128x128xf32>,
    return
  }
  func.func @transform_0(%arg0: i32) -> (i32, i32) {
    %c0_i32 = arith.constant 0 : i32
    %c0_i32_0 = arith.constant 0 : i32
    return %arg0, %c0_i32 : i32, i32
  }
  func.func @transform_1(%arg0: i32) -> (i32, i32) {
    %c0_i32 = arith.constant 0 : i32
    %c0_i32_0 = arith.constant 0 : i32
    %c0_i32_1 = arith.constant 0 : i32
    return %c0_i32, %c0_i32_0 : i32, i32
  }
  func.func @transform_2(%arg0: i32) -> (i32, i32) {
    %c0_i32 = arith.constant 0 : i32
    %c0_i32_0 = arith.constant 0 : i32
    %c0_i32_1 = arith.constant 0 : i32
    return %c0_i32, %c0_i32_0 : i32, i32
  }
  func.func @transform_3(%arg0: i32) -> (i32, i32) {
    %c0_i32 = arith.constant 0 : i32
    %c0_i32_0 = arith.constant 0 : i32
    %c0_i32_1 = arith.constant 0 : i32
    return %c0_i32, %c0_i32_0 : i32, i32
  }
  func.func @transform_4(%arg0: i32) -> (i32, i32) {
    %c0_i32 = arith.constant 0 : i32
    %c0_i32_0 = arith.constant 0 : i32
    %c0_i32_1 = arith.constant 0 : i32
    return %c0_i32, %c0_i32_0 : i32, i32
  }
  func.func @transform_5(%arg0: i32) -> (i32, i32) {
    %c0_i32 = arith.constant 0 : i32
    %c0_i32_0 = arith.constant 0 : i32
    %c0_i32_1 = arith.constant 0 : i32
    return %c0_i32, %c0_i32_0 : i32, i32
  }
  func.func @transform_6(%arg0: i32) -> (i32, i32) {
    %c0_i32 = arith.constant 0 : i32
    %c0_i32_0 = arith.constant 0 : i32
    %c0_i32_1 = arith.constant 0 : i32
    return %c0_i32, %c0_i32_0 : i32, i32
  }
  func.func @transform_7(%arg0: i32) -> (i32, i32) {
    %c0_i32 = arith.constant 0 : i32
    %c0_i32_0 = arith.constant 0 : i32
    return %arg0, %c0_i32 : i32, i32
  }
}

</mosaic_0001>

<llo_original>
// kernel: tpu_custom_call.1
$region0: #{tpu_custom_call.1}
  #allocation0 [shape = 'u32[]', space=smem, size = 0x4, offset = 0x4, fixed_abs, tag = 'smem constant byte address 0x4 - core index']
  #allocation1 [shape = 'u32[72,128]{1,0:T(1,128)}', space=vmem, size = 0x9000, scoped, tag = 'internal scratch']
  %s0 = inlined_call_operand.hbm [shape: f32[256,128], index: 0, kind: input, shape index: {}]
  %s1 = inlined_call_operand.hbm [shape: f32[128,128], index: 1, kind: input, shape index: {}]
  %s2 = inlined_call_operand.vmem [shape: f32[1,128], index: 2, kind: input, shape index: {}]
  %s3 = inlined_call_operand.hbm [shape: f32[128,128], index: 3, kind: input, shape index: {}]
  %s4 = inlined_call_operand.vmem [shape: f32[1,128], index: 4, kind: input, shape index: {}]
  %s5 = inlined_call_operand.hbm [shape: f32[128,128], index: 5, kind: input, shape index: {}]
  %s6 = inlined_call_operand.vmem [shape: f32[1,128], index: 6, kind: input, shape index: {}]
  %s7 = inlined_call_operand.hbm [shape: f32[256,128], index: 7, kind: output, shape index: {}]
  %s8 = sld [smem:[#allocation0]]
  $region77: #{tpu_custom_call.1} parent=0
    _
  %s10 = ssub.s32 1, %s8
  %s11 = scalar_select 0, %s10, %s8
  $region1: #{tpu_custom_call.1} parent=0
    #allocation2 [shape = 'u8[131072]{0}', space=vmem, size = 0x20000, scoped, tag = 'input window, operand 0']
    #allocation3 [shape = 's32[2]{0}', space=sflag, size = 0x8, scoped, tag = 'scoped memory for tpu_custom_call.1']
    #allocation4 [shape = 's32[2]{0}', space=sflag, size = 0x8, scoped, tag = 'scoped memory for tpu_custom_call.1']
    #allocation5 [shape = 'u8[65536]{0}', space=vmem, size = 0x10000, scoped, tag = 'input window, operand 1, single buffered']
    #allocation6 [shape = 's32[1]{0}', space=sflag, size = 0x4, scoped, tag = 'scoped memory for tpu_custom_call.1']
    #allocation7 [shape = 'u8[65536]{0}', space=vmem, size = 0x10000, scoped, tag = 'input window, operand 3, single buffered']
    #allocation8 [shape = 'u8[65536]{0}', space=vmem, size = 0x10000, scoped, tag = 'input window, operand 5, single buffered']
    #allocation9 [shape = 's32[1]{0}', space=sflag, size = 0x4, scoped, tag = 'scoped memory for tpu_custom_call.1']
    #allocation10 [shape = 'u8[131072]{0}', space=vmem, size = 0x20000, scoped, tag = 'output window, operand 0']
    %12 = vsyncpa [#allocation3], 0
    %s13 = scalar_lea.sflag [#allocation3], 1
    %14 = vsyncpa %s13, 0
    %15 = vsyncpa [#allocation6], 0
    %16 = vsyncpa [#allocation9], 0
    %17 = vsyncpa [#allocation4], 0
    %s18 = scalar_lea.sflag [#allocation4], 1
    %19 = vsyncpa %s18, 0
    loop: start=0, step=1, limit=4
    $region2: #{tpu_custom_call.1} parent=1 // loop_pre_header
      _
    $region3: #{tpu_custom_call.1} parent=1 // loop_header
      %s21 = sphi 0, %s25
      %p22 = scmp.ge.s32.totalorder %s21, 4
      %s31 = sphi 0, %s33
      %s34 = sphi 0, %s31
      %s35 = sphi 0, %s34
      %s51 = sphi 0, %s35
      %s55 = sphi 0, %s55
      %s57 = sphi 0, %s55
      %s58 = sphi 0, %s57
      %s72 = sphi 0, %s58
      %s76 = sphi 0, %s76
      %s78 = sphi 0, %s76
      %s79 = sphi 0, %s78
      %s93 = sphi 0, %s79
      %s97 = sphi 0, %s97
      %s99 = sphi 0, %s97
      %s100 = sphi 0, %s99
      %s114 = sphi 0, %s100
      %s118 = sphi 0, %s118
      %s120 = sphi 0, %s118
      %s121 = sphi 0, %s120
      %s135 = sphi 0, %s121
      %s139 = sphi 0, %s139
      %s141 = sphi 0, %s139
      %s142 = sphi 0, %s141
      %s156 = sphi 0, %s142
      %s160 = sphi 0, %s160
      %s162 = sphi 0, %s160
      %s163 = sphi 0, %s162
      %s177 = sphi 0, %s163
      %s183 = sphi 0, %s185
      %s186 = sphi 0, %s183
      %s187 = sphi 0, %s186
      %s203 = sphi 0, %s187
    $region4: #{tpu_custom_call.1} parent=1 // loop_header_branch
      %24 = sbr.rel (%p22) target = $region8
    $region5: #{tpu_custom_call.1} parent=1 // loop_body
      %s26 = ssub.s32 %s21, 1
      %s27 = ssub.s32 %s21, 2
      %s28 = sadd.s32 %s21, 1
      %s29 = ssub.s32 %s21, %s28
      %p30 = scmp.eq.s32.totalorder %s29, 0
      %s32 = sadd.s32 %s31, 1
      %s33 = scalar_select %p30, %s31, %s32
      %p36 = pneg %p30
      %p37 = scmp.eq.s32.totalorder %s21, 1
      %p38 = por %p36, %p37
      %p39 = scmp.ne.s32.totalorder %s31, %s34
      %p40 = scmp.eq.s32.totalorder %s21, 0
      %p41 = por %p39, %p40
      %p42 = scmp.ne.s32.totalorder %s31, %s34
      %p43 = scmp.eq.s32.totalorder %s26, 1
      %p44 = por %p42, %p43
      %p45 = scmp.ne.s32.totalorder %s34, %s35
      %p46 = scmp.eq.s32.totalorder %s26, 0
      %p47 = por %p45, %p46
      %p48 = scmp.ne.s32.totalorder %s34, %s35
      %p49 = scmp.eq.s32.totalorder %s27, 1
      %p50 = por %p48, %p49
      %p52 = scmp.ne.s32.totalorder %s35, %s51
      %p53 = scmp.eq.s32.totalorder %s27, 0
      %p54 = por %p52, %p53
      %s56 = sadd.s32 %s55, 1
      %p59 = scmp.eq.s32.totalorder %s21, 1
      %p60 = scmp.ne.s32.totalorder %s55, %s57
      %p61 = scmp.eq.s32.totalorder %s21, 0
      %p62 = por %p60, %p61
      %p63 = scmp.ne.s32.totalorder %s55, %s57
      %p64 = scmp.eq.s32.totalorder %s26, 1
      %p65 = por %p63, %p64
      %p66 = scmp.ne.s32.totalorder %s57, %s58
      %p67 = scmp.eq.s32.totalorder %s26, 0
      %p68 = por %p66, %p67
      %p69 = scmp.ne.s32.totalorder %s57, %s58
      %p70 = scmp.eq.s32.totalorder %s27, 1
      %p71 = por %p69, %p70
      %p73 = scmp.ne.s32.totalorder %s58, %s72
      %p74 = scmp.eq.s32.totalorder %s27, 0
      %p75 = por %p73, %p74
      %s77 = sadd.s32 %s76, 1
      %p80 = scmp.eq.s32.totalorder %s21, 1
      %p81 = scmp.ne.s32.totalorder %s76, %s78
      %p82 = scmp.eq.s32.totalorder %s21, 0
      %p83 = por %p81, %p82
      %p84 = scmp.ne.s32.totalorder %s76, %s78
      %p85 = scmp.eq.s32.totalorder %s26, 1
      %p86 = por %p84, %p85
      %p87 = scmp.ne.s32.totalorder %s78, %s79
      %p88 = scmp.eq.s32.totalorder %s26, 0
      %p89 = por %p87, %p88
      %p90 = scmp.ne.s32.totalorder %s78, %s79
      %p91 = scmp.eq.s32.totalorder %s27, 1
      %p92 = por %p90, %p91
      %p94 = scmp.ne.s32.totalorder %s79, %s93
      %p95 = scmp.eq.s32.totalorder %s27, 0
      %p96 = por %p94, %p95
      %s98 = sadd.s32 %s97, 1
      %p101 = scmp.eq.s32.totalorder %s21, 1
      %p102 = scmp.ne.s32.totalorder %s97, %s99
      %p103 = scmp.eq.s32.totalorder %s21, 0
      %p104 = por %p102, %p103
      %p105 = scmp.ne.s32.totalorder %s97, %s99
      %p106 = scmp.eq.s32.totalorder %s26, 1
      %p107 = por %p105, %p106
      %p108 = scmp.ne.s32.totalorder %s99, %s100
      %p109 = scmp.eq.s32.totalorder %s26, 0
      %p110 = por %p108, %p109
      %p111 = scmp.ne.s32.totalorder %s99, %s100
      %p112 = scmp.eq.s32.totalorder %s27, 1
      %p113 = por %p111, %p112
      %p115 = scmp.ne.s32.totalorder %s100, %s114
      %p116 = scmp.eq.s32.totalorder %s27, 0
      %p117 = por %p115, %p116
      %s119 = sadd.s32 %s118, 1
      %p122 = scmp.eq.s32.totalorder %s21, 1
      %p123 = scmp.ne.s32.totalorder %s118, %s120
      %p124 = scmp.eq.s32.totalorder %s21, 0
      %p125 = por %p123, %p124
      %p126 = scmp.ne.s32.totalorder %s118, %s120
      %p127 = scmp.eq.s32.totalorder %s26, 1
      %p128 = por %p126, %p127
      %p129 = scmp.ne.s32.totalorder %s120, %s121
      %p130 = scmp.eq.s32.totalorder %s26, 0
      %p131 = por %p129, %p130
      %p132 = scmp.ne.s32.totalorder %s120, %s121
      %p133 = scmp.eq.s32.totalorder %s27, 1
      %p134 = por %p132, %p133
      %p136 = scmp.ne.s32.totalorder %s121, %s135
      %p137 = scmp.eq.s32.totalorder %s27, 0
      %p138 = por %p136, %p137
      %s140 = sadd.s32 %s139, 1
      %p143 = scmp.eq.s32.totalorder %s21, 1
      %p144 = scmp.ne.s32.totalorder %s139, %s141
      %p145 = scmp.eq.s32.totalorder %s21, 0
      %p146 = por %p144, %p145
      %p147 = scmp.ne.s32.totalorder %s139, %s141
      %p148 = scmp.eq.s32.totalorder %s26, 1
      %p149 = por %p147, %p148
      %p150 = scmp.ne.s32.totalorder %s141, %s142
      %p151 = scmp.eq.s32.totalorder %s26, 0
      %p152 = por %p150, %p151
      %p153 = scmp.ne.s32.totalorder %s141, %s142
      %p154 = scmp.eq.s32.totalorder %s27, 1
      %p155 = por %p153, %p154
      %p157 = scmp.ne.s32.totalorder %s142, %s156
      %p158 = scmp.eq.s32.totalorder %s27, 0
      %p159 = por %p157, %p158
      %s161 = sadd.s32 %s160, 1
      %p164 = scmp.eq.s32.totalorder %s21, 1
      %p165 = scmp.ne.s32.totalorder %s160, %s162
      %p166 = scmp.eq.s32.totalorder %s21, 0
      %p167 = por %p165, %p166
      %p168 = scmp.ne.s32.totalorder %s160, %s162
      %p169 = scmp.eq.s32.totalorder %s26, 1
      %p170 = por %p168, %p169
      %p171 = scmp.ne.s32.totalorder %s162, %s163
      %p172 = scmp.eq.s32.totalorder %s26, 0
      %p173 = por %p171, %p172
      %p174 = scmp.ne.s32.totalorder %s162, %s163
      %p175 = scmp.eq.s32.totalorder %s27, 1
      %p176 = por %p174, %p175
      %p178 = scmp.ne.s32.totalorder %s163, %s177
      %p179 = scmp.eq.s32.totalorder %s27, 0
      %p180 = por %p178, %p179
      %s181 = ssub.s32 %s21, %s28
      %p182 = scmp.eq.s32.totalorder %s181, 0
      %s184 = sadd.s32 %s183, 1
      %s185 = scalar_select %p182, %s183, %s184
      %p188 = pneg %p182
      %p189 = scmp.eq.s32.totalorder %s21, 1
      %p190 = por %p188, %p189
      %p191 = scmp.ne.s32.totalorder %s183, %s186
      %p192 = scmp.eq.s32.totalorder %s21, 0
      %p193 = por %p191, %p192
      %p194 = scmp.ne.s32.totalorder %s183, %s186
      %p195 = scmp.eq.s32.totalorder %s26, 1
      %p196 = por %p194, %p195
      %p197 = scmp.ne.s32.totalorder %s186, %s187
      %p198 = scmp.eq.s32.totalorder %s26, 0
      %p199 = por %p197, %p198
      %p200 = scmp.ne.s32.totalorder %s186, %s187
      %p201 = scmp.eq.s32.totalorder %s27, 1
      %p202 = por %p200, %p201
      %p204 = scmp.ne.s32.totalorder %s187, %s203
      %p205 = scmp.eq.s32.totalorder %s27, 0
      %p206 = por %p204, %p205
      %p207 = scmp.le.s32.totalorder 1, %s21
      %p208 = scmp.lt.s32.totalorder %s21, 3
      %p209 = pnand %p207, %p208
      %p210 = pneg %p209
      // Predicated region
      $region9: #{tpu_custom_call.1} parent=5 // pred_check
        _
      $region10: #{tpu_custom_call.1} parent=5 // pred_check_branch
        %212 = sbr.rel (%p209) target = $region12
      $region11: #{tpu_custom_call.1} parent=5 // pred_region
        %s213 = ssub.s32 %s21, 1
        // Predicated region
        $region13: #{tpu_custom_call.1} parent=11 // pred_check
          %p214 = pneg %p68
        $region14: #{tpu_custom_call.1} parent=11 // pred_check_branch
          %216 = sbr.rel (%p214) target = $region16
        $region15: #{tpu_custom_call.1} parent=11 // pred_region
          %218 = vsyncadd [#allocation6], 0
          %s219 = sshll.u32 %s1, 4
          %s220 = int_to_ptr.hbm [resolvable:$true] %s219
          %s221 = sshll.u32 [#allocation5], 4
          %s222 = int_to_ptr.vmem [resolvable:$true] %s221
          %227 = dma.hbm_to_vmem [thread:$0]  %s220, 2048, %s222, [#allocation6], 128, 128, 8
        $region16: #{tpu_custom_call.1} parent=11 // pred_fallthru
          _
        // Predicated region
        $region17: #{tpu_custom_call.1} parent=11 // pred_check
          %p228 = pneg %p89
        $region18: #{tpu_custom_call.1} parent=11 // pred_check_branch
          %230 = sbr.rel (%p228) target = $region20
        $region19: #{tpu_custom_call.1} parent=11 // pred_region
          _
        $region20: #{tpu_custom_call.1} parent=11 // pred_fallthru
          _
        // Predicated region
        $region21: #{tpu_custom_call.1} parent=11 // pred_check
          %p231 = pneg %p110
        $region22: #{tpu_custom_call.1} parent=11 // pred_check_branch
          %233 = sbr.rel (%p231) target = $region24
        $region23: #{tpu_custom_call.1} parent=11 // pred_region
          %235 = vsyncadd [#allocation6], 0
          %s236 = sshll.u32 %s3, 4
          %s237 = int_to_ptr.hbm [resolvable:$true] %s236
          %s238 = sshll.u32 [#allocation7], 4
          %s239 = int_to_ptr.vmem [resolvable:$true] %s238
          %244 = dma.hbm_to_vmem [thread:$0]  %s237, 2048, %s239, [#allocation6], 128, 128, 8
        $region24: #{tpu_custom_call.1} parent=11 // pred_fallthru
          _
        // Predicated region
        $region25: #{tpu_custom_call.1} parent=11 // pred_check
          %p245 = pneg %p131
        $region26: #{tpu_custom_call.1} parent=11 // pred_check_branch
          %247 = sbr.rel (%p245) target = $region28
        $region27: #{tpu_custom_call.1} parent=11 // pred_region
          _
        $region28: #{tpu_custom_call.1} parent=11 // pred_fallthru
          _
        // Predicated region
        $region29: #{tpu_custom_call.1} parent=11 // pred_check
          %p248 = pneg %p152
        $region30: #{tpu_custom_call.1} parent=11 // pred_check_branch
          %250 = sbr.rel (%p248) target = $region32
        $region31: #{tpu_custom_call.1} parent=11 // pred_region
          %252 = vsyncadd [#allocation9], 0
          %s253 = sshll.u32 %s5, 4
          %s254 = int_to_ptr.hbm [resolvable:$true] %s253
          %s255 = sshll.u32 [#allocation8], 4
          %s256 = int_to_ptr.vmem [resolvable:$true] %s255
          %261 = dma.hbm_to_vmem [thread:$0]  %s254, 2048, %s256, [#allocation9], 128, 128, 8
        $region32: #{tpu_custom_call.1} parent=11 // pred_fallthru
          _
        // Predicated region
        $region33: #{tpu_custom_call.1} parent=11 // pred_check
          %p262 = pneg %p173
        $region34: #{tpu_custom_call.1} parent=11 // pred_check_branch
          %264 = sbr.rel (%p262) target = $region36
        $region35: #{tpu_custom_call.1} parent=11 // pred_region
          _
        $region36: #{tpu_custom_call.1} parent=11 // pred_fallthru
          _
      $region12: #{tpu_custom_call.1} parent=5 // pred_fallthru
        _
      %p265 = scmp.lt.s32.totalorder %s21, 2
      // Predicated region
      $region37: #{tpu_custom_call.1} parent=5 // pred_check
        %p266 = pneg %p265
      $region38: #{tpu_custom_call.1} parent=5 // pred_check_branch
        %268 = sbr.rel (%p266) target = $region40
      $region39: #{tpu_custom_call.1} parent=5 // pred_region
        // Predicated region
        $region41: #{tpu_custom_call.1} parent=39 // pred_check
          %p269 = pneg %p41
        $region42: #{tpu_custom_call.1} parent=39 // pred_check_branch
          %271 = sbr.rel (%p269) target = $region44
        $region43: #{tpu_custom_call.1} parent=39 // pred_region
          %s272 = sand.u32 %s31, 1
          %s273 = scalar_lea.sflag [#allocation3], %s272
          %s274 = sand.u32 %s31, 1
          %s275 = smul.addr %s274, 128
          %s276 = scalar_lea.vmem [#allocation2], %s275
          %s277 = smul.u32 16, %s21
          %279 = vsyncadd %s273, 0
          %s280 = smul.addr %s277, 8
          %s281 = scalar_lea.hbm %s0, %s280
          %s282 = sshll.u32 %s281, 4
          %s283 = int_to_ptr.hbm [resolvable:$true] %s282
          %s284 = sshll.u32 %s276, 4
          %s285 = int_to_ptr.vmem [resolvable:$true] %s284
          %290 = dma.hbm_to_vmem [thread:$0]  %s283, 2048, %s285, %s273, 128, 128, 8
        $region44: #{tpu_custom_call.1} parent=39 // pred_fallthru
          _
      $region40: #{tpu_custom_call.1} parent=5 // pred_fallthru
        _
      %p291 = scmp.le.s32.totalorder 1, %s21
      %p292 = scmp.lt.s32.totalorder %s21, 3
      %p293 = pnand %p291, %p292
      %p294 = pneg %p293
      // Predicated region
      $region45: #{tpu_custom_call.1} parent=5 // pred_check
        _
      $region46: #{tpu_custom_call.1} parent=5 // pred_check_branch
        %296 = sbr.rel (%p293) target = $region48
      $region47: #{tpu_custom_call.1} parent=5 // pred_region
        %s297 = ssub.s32 %s21, 1
        %s298 = sand.u32 %s34, 1
        %s299 = scalar_lea.sflag [#allocation3], %s298
        %s300 = sand.u32 %s34, 1
        %s301 = smul.addr %s300, 128
        %s302 = scalar_lea.vmem [#allocation2], %s301
        // Predicated region
        $region49: #{tpu_custom_call.1} parent=47 // pred_check
          %p303 = pneg %p47
        $region50: #{tpu_custom_call.1} parent=47 // pred_check_branch
          %305 = sbr.rel (%p303) target = $region52
        $region51: #{tpu_custom_call.1} parent=47 // pred_region
          %307 = dma.done %s299, 2048
        $region52: #{tpu_custom_call.1} parent=47 // pred_fallthru
          _
        // Predicated region
        $region53: #{tpu_custom_call.1} parent=47 // pred_check
          %p308 = pneg %p68
        $region54: #{tpu_custom_call.1} parent=47 // pred_check_branch
          %310 = sbr.rel (%p308) target = $region56
        $region55: #{tpu_custom_call.1} parent=47 // pred_region
          %312 = dma.done [#allocation6], 2048
        $region56: #{tpu_custom_call.1} parent=47 // pred_fallthru
          _
        // Predicated region
        $region57: #{tpu_custom_call.1} parent=47 // pred_check
          %p313 = pneg %p110
        $region58: #{tpu_custom_call.1} parent=47 // pred_check_branch
          %315 = sbr.rel (%p313) target = $region60
        $region59: #{tpu_custom_call.1} parent=47 // pred_region
          %317 = dma.done [#allocation6], 2048
        $region60: #{tpu_custom_call.1} parent=47 // pred_fallthru
          _
        // Predicated region
        $region61: #{tpu_custom_call.1} parent=47 // pred_check
          %p318 = pneg %p152
        $region62: #{tpu_custom_call.1} parent=47 // pred_check_branch
          %320 = sbr.rel (%p318) target = $region64
        $region63: #{tpu_custom_call.1} parent=47 // pred_region
          %322 = dma.done [#allocation9], 2048
        $region64: #{tpu_custom_call.1} parent=47 // pred_fallthru
          _
        %s323 = sand.u32 %s34, 1
        %s324 = scalar_lea.sflag [#allocation3], %s323
        %s325 = sand.u32 %s34, 1
        %s326 = smul.addr %s325, 128
        %s327 = scalar_lea.vmem [#allocation2], %s326
        %p328 = pneg %p47
        %p329 = pneg %p44
        %p330 = pneg %p68
        %p331 = pneg %p65
        %p332 = pneg %p89
        %p333 = pneg %p86
        %p334 = pneg %p110
        %p335 = pneg %p107
        %p336 = pneg %p131
        %p337 = pneg %p128
        %p338 = pneg %p152
        %p339 = pneg %p149
        %p340 = pneg %p173
        %p341 = pneg %p170
        %p342 = pneg %p199
        %p343 = pneg %p196
        %s344 = sand.u32 %s186, 1
        %s345 = scalar_lea.sflag [#allocation4], %s344
        %s346 = sand.u32 %s186, 1
        %s347 = smul.addr %s346, 128
        %s348 = scalar_lea.vmem [#allocation10], %s347
        %s349 = smul.u32 16, %s26
        %s350 = smul.u32 16, %s26
        %v351 = vld [vmem:[%s302] sm:$0xff]
        %v352 = vld [vmem:[%s302 + $0x8] sm:$0xff]
        %v353 = vld [vmem:[%s302 + $0x10] sm:$0xff]
        %v354 = vld [vmem:[%s302 + $0x18] sm:$0xff]
        %v355 = vld [vmem:[%s302 + $0x20] sm:$0xff]
        %v356 = vld [vmem:[%s302 + $0x28] sm:$0xff]
        %v357 = vld [vmem:[%s302 + $0x30] sm:$0xff]
        %v358 = vld [vmem:[%s302 + $0x38] sm:$0xff]
        %v359 = vld [vmem:[%s302 + $0x40] sm:$0xff]
        %v360 = vld [vmem:[%s302 + $0x48] sm:$0xff]
        %v361 = vld [vmem:[%s302 + $0x50] sm:$0xff]
        %v362 = vld [vmem:[%s302 + $0x58] sm:$0xff]
        %v363 = vld [vmem:[%s302 + $0x60] sm:$0xff]
        %v364 = vld [vmem:[%s302 + $0x68] sm:$0xff]
        %v365 = vld [vmem:[%s302 + $0x70] sm:$0xff]
        %v366 = vld [vmem:[%s302 + $0x78] sm:$0xff]
        %v367 = vld [vmem:[#allocation5] sm:$0xff]
        %v368 = vld [vmem:[#allocation5 + $0x8] sm:$0xff]
        %v369 = vld [vmem:[#allocation5 + $0x10] sm:$0xff]
        %v370 = vld [vmem:[#allocation5 + $0x18] sm:$0xff]
        %v371 = vld [vmem:[#allocation5 + $0x20] sm:$0xff]
        %v372 = vld [vmem:[#allocation5 + $0x28] sm:$0xff]
        %v373 = vld [vmem:[#allocation5 + $0x30] sm:$0xff]
        %v374 = vld [vmem:[#allocation5 + $0x38] sm:$0xff]
        %v375 = vld [vmem:[#allocation5 + $0x40] sm:$0xff]
        %v376 = vld [vmem:[#allocation5 + $0x48] sm:$0xff]
        %v377 = vld [vmem:[#allocation5 + $0x50] sm:$0xff]
        %v378 = vld [vmem:[#allocation5 + $0x58] sm:$0xff]
        %v379 = vld [vmem:[#allocation5 + $0x60] sm:$0xff]
        %v380 = vld [vmem:[#allocation5 + $0x68] sm:$0xff]
        %v381 = vld [vmem:[#allocation5 + $0x70] sm:$0xff]
        %v382 = vld [vmem:[#allocation5 + $0x78] sm:$0xff]
        %v383 = vld [vmem:[%s2] sm:$0x1]
        %v385 = vperm.slane %v383, 0
        %387 = vmatpush.msra.mxu0 %v382
        %388 = vmatpush.msra.mxu0 %v381
        %389 = vmatpush.msra.mxu0 %v380
        %390 = vmatpush.msra.mxu0 %v379
        %391 = vmatpush.msra.mxu0 %v378
        %392 = vmatpush.msra.mxu0 %v377
        %393 = vmatpush.msra.mxu0 %v376
        %394 = vmatpush.msra.mxu0 %v375
        %395 = vmatpush.msra.mxu0 %v374
        %396 = vmatpush.msra.mxu0 %v373
        %397 = vmatpush.msra.mxu0 %v372
        %398 = vmatpush.msra.mxu0 %v371
        %399 = vmatpush.msra.mxu0 %v370
        %400 = vmatpush.msra.mxu0 %v369
        %401 = vmatpush.msra.mxu0 %v368
        %402 = vmatpush.msra.mxu0 %v367
        %403 = vmatmul.f32.gmra.mxu0 %v351
        %v404 = vpop.f32.mrf.mxu0
        %v405 = vadd.f32 %v385, %v404
        %406 = vmatmul.f32.gmra.mxu0 %v352
        %v407 = vpop.f32.mrf.mxu0
        %v408 = vadd.f32 %v385, %v407
        %409 = vmatmul.f32.gmra.mxu0 %v353
        %v410 = vpop.f32.mrf.mxu0
        %v411 = vadd.f32 %v385, %v410
        %412 = vmatmul.f32.gmra.mxu0 %v354
        %v413 = vpop.f32.mrf.mxu0
        %v414 = vadd.f32 %v385, %v413
        %415 = vmatmul.f32.gmra.mxu0 %v355
        %v416 = vpop.f32.mrf.mxu0
        %v417 = vadd.f32 %v385, %v416
        %418 = vmatmul.f32.gmra.mxu0 %v356
        %v419 = vpop.f32.mrf.mxu0
        %v420 = vadd.f32 %v385, %v419
        %421 = vmatmul.f32.gmra.mxu0 %v357
        %v422 = vpop.f32.mrf.mxu0
        %v423 = vadd.f32 %v385, %v422
        %424 = vmatmul.f32.gmra.mxu0 %v358
        %v425 = vpop.f32.mrf.mxu0
        %v426 = vadd.f32 %v385, %v425
        %427 = vmatmul.f32.gmra.mxu0 %v359
        %v428 = vpop.f32.mrf.mxu0
        %v429 = vadd.f32 %v385, %v428
        %430 = vmatmul.f32.gmra.mxu0 %v360
        %v431 = vpop.f32.mrf.mxu0
        %v432 = vadd.f32 %v385, %v431
        %433 = vmatmul.f32.gmra.mxu0 %v361
        %v434 = vpop.f32.mrf.mxu0
        %v435 = vadd.f32 %v385, %v434
        %436 = vmatmul.f32.gmra.mxu0 %v362
        %v437 = vpop.f32.mrf.mxu0
        %v438 = vadd.f32 %v385, %v437
        %439 = vmatmul.f32.gmra.mxu0 %v363
        %v440 = vpop.f32.mrf.mxu0
        %v441 = vadd.f32 %v385, %v440
        %442 = vmatmul.f32.gmra.mxu0 %v364
        %v443 = vpop.f32.mrf.mxu0
        %v444 = vadd.f32 %v385, %v443
        %445 = vmatmul.f32.gmra.mxu0 %v365
        %v446 = vpop.f32.mrf.mxu0
        %v447 = vadd.f32 %v385, %v446
        %448 = vmatmul.f32.gmra.mxu0 %v366
        %v449 = vpop.f32.mrf.mxu0
        %v450 = vadd.f32 %v385, %v449
        %451 = vdwg.mxu0
        %v452 = vmax.f32 %v405, 0.0
        %v453 = vmax.f32 %v408, 0.0
        %v454 = vmax.f32 %v411, 0.0
        %v455 = vmax.f32 %v414, 0.0
        %v456 = vmax.f32 %v417, 0.0
        %v457 = vmax.f32 %v420, 0.0
        %v458 = vmax.f32 %v423, 0.0
        %v459 = vmax.f32 %v426, 0.0
        %v460 = vmax.f32 %v429, 0.0
        %v461 = vmax.f32 %v432, 0.0
        %v462 = vmax.f32 %v435, 0.0
        %v463 = vmax.f32 %v438, 0.0
        %v464 = vmax.f32 %v441, 0.0
        %v465 = vmax.f32 %v444, 0.0
        %v466 = vmax.f32 %v447, 0.0
        %v467 = vmax.f32 %v450, 0.0
        %v468 = vld [vmem:[#allocation7] sm:$0xff]
        %v469 = vld [vmem:[#allocation7 + $0x8] sm:$0xff]
        %v470 = vld [vmem:[#allocation7 + $0x10] sm:$0xff]
        %v471 = vld [vmem:[#allocation7 + $0x18] sm:$0xff]
        %v472 = vld [vmem:[#allocation7 + $0x20] sm:$0xff]
        %v473 = vld [vmem:[#allocation7 + $0x28] sm:$0xff]
        %v474 = vld [vmem:[#allocation7 + $0x30] sm:$0xff]
        %v475 = vld [vmem:[#allocation7 + $0x38] sm:$0xff]
        %v476 = vld [vmem:[#allocation7 + $0x40] sm:$0xff]
        %v477 = vld [vmem:[#allocation7 + $0x48] sm:$0xff]
        %v478 = vld [vmem:[#allocation7 + $0x50] sm:$0xff]
        %v479 = vld [vmem:[#allocation7 + $0x58] sm:$0xff]
        %v480 = vld [vmem:[#allocation7 + $0x60] sm:$0xff]
        %v481 = vld [vmem:[#allocation7 + $0x68] sm:$0xff]
        %v482 = vld [vmem:[#allocation7 + $0x70] sm:$0xff]
        %v483 = vld [vmem:[#allocation7 + $0x78] sm:$0xff]
        %v484 = vld [vmem:[%s4] sm:$0x1]
        %v486 = vperm.slane %v484, 0
        %488 = vmatpush.msra.mxu0 %v483
        %489 = vmatpush.msra.mxu0 %v482
        %490 = vmatpush.msra.mxu0 %v481
        %491 = vmatpush.msra.mxu0 %v480
        %492 = vmatpush.msra.mxu0 %v479
        %493 = vmatpush.msra.mxu0 %v478
        %494 = vmatpush.msra.mxu0 %v477
        %495 = vmatpush.msra.mxu0 %v476
        %496 = vmatpush.msra.mxu0 %v475
        %497 = vmatpush.msra.mxu0 %v474
        %498 = vmatpush.msra.mxu0 %v473
        %499 = vmatpush.msra.mxu0 %v472
        %500 = vmatpush.msra.mxu0 %v471
        %501 = vmatpush.msra.mxu0 %v470
        %502 = vmatpush.msra.mxu0 %v469
        %503 = vmatpush.msra.mxu0 %v468
        %504 = vmatmul.f32.gmra.mxu0 %v452
        %v505 = vpop.f32.mrf.mxu0
        %v506 = vadd.f32 %v486, %v505
        %507 = vmatmul.f32.gmra.mxu0 %v453
        %v508 = vpop.f32.mrf.mxu0
        %v509 = vadd.f32 %v486, %v508
        %510 = vmatmul.f32.gmra.mxu0 %v454
        %v511 = vpop.f32.mrf.mxu0
        %v512 = vadd.f32 %v486, %v511
        %513 = vmatmul.f32.gmra.mxu0 %v455
        %v514 = vpop.f32.mrf.mxu0
        %v515 = vadd.f32 %v486, %v514
        %516 = vmatmul.f32.gmra.mxu0 %v456
        %v517 = vpop.f32.mrf.mxu0
        %v518 = vadd.f32 %v486, %v517
        %519 = vmatmul.f32.gmra.mxu0 %v457
        %v520 = vpop.f32.mrf.mxu0
        %v521 = vadd.f32 %v486, %v520
        %522 = vmatmul.f32.gmra.mxu0 %v458
        %v523 = vpop.f32.mrf.mxu0
        %v524 = vadd.f32 %v486, %v523
        %525 = vmatmul.f32.gmra.mxu0 %v459
        %v526 = vpop.f32.mrf.mxu0
        %v527 = vadd.f32 %v486, %v526
        %528 = vmatmul.f32.gmra.mxu0 %v460
        %v529 = vpop.f32.mrf.mxu0
        %v530 = vadd.f32 %v486, %v529
        %531 = vmatmul.f32.gmra.mxu0 %v461
        %v532 = vpop.f32.mrf.mxu0
        %v533 = vadd.f32 %v486, %v532
        %534 = vmatmul.f32.gmra.mxu0 %v462
        %v535 = vpop.f32.mrf.mxu0
        %v536 = vadd.f32 %v486, %v535
        %537 = vmatmul.f32.gmra.mxu0 %v463
        %v538 = vpop.f32.mrf.mxu0
        %v539 = vadd.f32 %v486, %v538
        %540 = vmatmul.f32.gmra.mxu0 %v464
        %v541 = vpop.f32.mrf.mxu0
        %v542 = vadd.f32 %v486, %v541
        %543 = vmatmul.f32.gmra.mxu0 %v465
        %v544 = vpop.f32.mrf.mxu0
        %v545 = vadd.f32 %v486, %v544
        %546 = vmatmul.f32.gmra.mxu0 %v466
        %v547 = vpop.f32.mrf.mxu0
        %v548 = vadd.f32 %v486, %v547
        %549 = vmatmul.f32.gmra.mxu0 %v467
        %v550 = vpop.f32.mrf.mxu0
        %v551 = vadd.f32 %v486, %v550
        %552 = vdwg.mxu0
        %v553 = vmax.f32 %v506, 0.0
        %v554 = vmax.f32 %v509, 0.0
        %v555 = vmax.f32 %v512, 0.0
        %v556 = vmax.f32 %v515, 0.0
        %v557 = vmax.f32 %v518, 0.0
        %v558 = vmax.f32 %v521, 0.0
        %v559 = vmax.f32 %v524, 0.0
        %v560 = vmax.f32 %v527, 0.0
        %v561 = vmax.f32 %v530, 0.0
        %v562 = vmax.f32 %v533, 0.0
        %v563 = vmax.f32 %v536, 0.0
        %v564 = vmax.f32 %v539, 0.0
        %v565 = vmax.f32 %v542, 0.0
        %v566 = vmax.f32 %v545, 0.0
        %v567 = vmax.f32 %v548, 0.0
        %v568 = vmax.f32 %v551, 0.0
        %569 = vmatpush.msra.mxu0 %v483
        %570 = vmatpush.msra.mxu0 %v482
        %571 = vmatpush.msra.mxu0 %v481
        %572 = vmatpush.msra.mxu0 %v480
        %573 = vmatpush.msra.mxu0 %v479
        %574 = vmatpush.msra.mxu0 %v478
        %575 = vmatpush.msra.mxu0 %v477
        %576 = vmatpush.msra.mxu0 %v476
        %577 = vmatpush.msra.mxu0 %v475
        %578 = vmatpush.msra.mxu0 %v474
        %579 = vmatpush.msra.mxu0 %v473
        %580 = vmatpush.msra.mxu0 %v472
        %581 = vmatpush.msra.mxu0 %v471
        %582 = vmatpush.msra.mxu0 %v470
        %583 = vmatpush.msra.mxu0 %v469
        %584 = vmatpush.msra.mxu0 %v468
        %585 = vmatmul.f32.gmra.mxu0 %v553
        %v586 = vpop.f32.mrf.mxu0
        %v587 = vadd.f32 %v486, %v586
        %588 = vmatmul.f32.gmra.mxu0 %v554
        %v589 = vpop.f32.mrf.mxu0
        %v590 = vadd.f32 %v486, %v589
        %591 = vmatmul.f32.gmra.mxu0 %v555
        %v592 = vpop.f32.mrf.mxu0
        %v593 = vadd.f32 %v486, %v592
        %594 = vmatmul.f32.gmra.mxu0 %v556
        %v595 = vpop.f32.mrf.mxu0
        %v596 = vadd.f32 %v486, %v595
        %597 = vmatmul.f32.gmra.mxu0 %v557
        %v598 = vpop.f32.mrf.mxu0
        %v599 = vadd.f32 %v486, %v598
        %600 = vmatmul.f32.gmra.mxu0 %v558
        %v601 = vpop.f32.mrf.mxu0
        %v602 = vadd.f32 %v486, %v601
        %603 = vmatmul.f32.gmra.mxu0 %v559
        %v604 = vpop.f32.mrf.mxu0
        %v605 = vadd.f32 %v486, %v604
        %606 = vmatmul.f32.gmra.mxu0 %v560
        %v607 = vpop.f32.mrf.mxu0
        %v608 = vadd.f32 %v486, %v607
        %609 = vmatmul.f32.gmra.mxu0 %v561
        %v610 = vpop.f32.mrf.mxu0
        %v611 = vadd.f32 %v486, %v610
        %612 = vmatmul.f32.gmra.mxu0 %v562
        %v613 = vpop.f32.mrf.mxu0
        %v614 = vadd.f32 %v486, %v613
        %615 = vmatmul.f32.gmra.mxu0 %v563
        %v616 = vpop.f32.mrf.mxu0
        %v617 = vadd.f32 %v486, %v616
        %618 = vmatmul.f32.gmra.mxu0 %v564
        %v619 = vpop.f32.mrf.mxu0
        %v620 = vadd.f32 %v486, %v619
        %621 = vmatmul.f32.gmra.mxu0 %v565
        %v622 = vpop.f32.mrf.mxu0
        %v623 = vadd.f32 %v486, %v622
        %624 = vmatmul.f32.gmra.mxu0 %v566
        %v625 = vpop.f32.mrf.mxu0
        %v626 = vadd.f32 %v486, %v625
        %627 = vmatmul.f32.gmra.mxu0 %v567
        %v628 = vpop.f32.mrf.mxu0
        %v629 = vadd.f32 %v486, %v628
        %630 = vmatmul.f32.gmra.mxu0 %v568
        %v631 = vpop.f32.mrf.mxu0
        %v632 = vadd.f32 %v486, %v631
        %633 = vdwg.mxu0
        %v634 = vmax.f32 %v587, 0.0
        %v635 = vmax.f32 %v590, 0.0
        %v636 = vmax.f32 %v593, 0.0
        %v637 = vmax.f32 %v596, 0.0
        %v638 = vmax.f32 %v599, 0.0
        %v639 = vmax.f32 %v602, 0.0
        %v640 = vmax.f32 %v605, 0.0
        %v641 = vmax.f32 %v608, 0.0
        %v642 = vmax.f32 %v611, 0.0
        %v643 = vmax.f32 %v614, 0.0
        %v644 = vmax.f32 %v617, 0.0
        %v645 = vmax.f32 %v620, 0.0
        %v646 = vmax.f32 %v623, 0.0
        %v647 = vmax.f32 %v626, 0.0
        %v648 = vmax.f32 %v629, 0.0
        %v649 = vmax.f32 %v632, 0.0
        %v650 = vld [vmem:[#allocation8] sm:$0xff]
        %v651 = vld [vmem:[#allocation8 + $0x8] sm:$0xff]
        %v652 = vld [vmem:[#allocation8 + $0x10] sm:$0xff]
        %v653 = vld [vmem:[#allocation8 + $0x18] sm:$0xff]
        %v654 = vld [vmem:[#allocation8 + $0x20] sm:$0xff]
        %v655 = vld [vmem:[#allocation8 + $0x28] sm:$0xff]
        %v656 = vld [vmem:[#allocation8 + $0x30] sm:$0xff]
        %v657 = vld [vmem:[#allocation8 + $0x38] sm:$0xff]
        %v658 = vld [vmem:[#allocation8 + $0x40] sm:$0xff]
        %v659 = vld [vmem:[#allocation8 + $0x48] sm:$0xff]
        %v660 = vld [vmem:[#allocation8 + $0x50] sm:$0xff]
        %v661 = vld [vmem:[#allocation8 + $0x58] sm:$0xff]
        %v662 = vld [vmem:[#allocation8 + $0x60] sm:$0xff]
        %v663 = vld [vmem:[#allocation8 + $0x68] sm:$0xff]
        %v664 = vld [vmem:[#allocation8 + $0x70] sm:$0xff]
        %v665 = vld [vmem:[#allocation8 + $0x78] sm:$0xff]
        %v666 = vld [vmem:[%s6] sm:$0x1]
        %v668 = vperm.slane %v666, 0
        %670 = vmatpush.msra.mxu0 %v665
        %671 = vmatpush.msra.mxu0 %v664
        %672 = vmatpush.msra.mxu0 %v663
        %673 = vmatpush.msra.mxu0 %v662
        %674 = vmatpush.msra.mxu0 %v661
        %675 = vmatpush.msra.mxu0 %v660
        %676 = vmatpush.msra.mxu0 %v659
        %677 = vmatpush.msra.mxu0 %v658
        %678 = vmatpush.msra.mxu0 %v657
        %679 = vmatpush.msra.mxu0 %v656
        %680 = vmatpush.msra.mxu0 %v655
        %681 = vmatpush.msra.mxu0 %v654
        %682 = vmatpush.msra.mxu0 %v653
        %683 = vmatpush.msra.mxu0 %v652
        %684 = vmatpush.msra.mxu0 %v651
        %685 = vmatpush.msra.mxu0 %v650
        %686 = vmatmul.f32.gmra.mxu0 %v634
        %v687 = vpop.f32.mrf.mxu0
        %v688 = vadd.f32 %v668, %v687
        %689 = vmatmul.f32.gmra.mxu0 %v635
        %v690 = vpop.f32.mrf.mxu0
        %v691 = vadd.f32 %v668, %v690
        %692 = vmatmul.f32.gmra.mxu0 %v636
        %v693 = vpop.f32.mrf.mxu0
        %v694 = vadd.f32 %v668, %v693
        %695 = vmatmul.f32.gmra.mxu0 %v637
        %v696 = vpop.f32.mrf.mxu0
        %v697 = vadd.f32 %v668, %v696
        %698 = vmatmul.f32.gmra.mxu0 %v638
        %v699 = vpop.f32.mrf.mxu0
        %v700 = vadd.f32 %v668, %v699
        %701 = vmatmul.f32.gmra.mxu0 %v639
        %v702 = vpop.f32.mrf.mxu0
        %v703 = vadd.f32 %v668, %v702
        %704 = vmatmul.f32.gmra.mxu0 %v640
        %v705 = vpop.f32.mrf.mxu0
        %v706 = vadd.f32 %v668, %v705
        %707 = vmatmul.f32.gmra.mxu0 %v641
        %v708 = vpop.f32.mrf.mxu0
        %v709 = vadd.f32 %v668, %v708
        %710 = vmatmul.f32.gmra.mxu0 %v642
        %v711 = vpop.f32.mrf.mxu0
        %v712 = vadd.f32 %v668, %v711
        %713 = vmatmul.f32.gmra.mxu0 %v643
        %v714 = vpop.f32.mrf.mxu0
        %v715 = vadd.f32 %v668, %v714
        %716 = vmatmul.f32.gmra.mxu0 %v644
        %v717 = vpop.f32.mrf.mxu0
        %v718 = vadd.f32 %v668, %v717
        %719 = vmatmul.f32.gmra.mxu0 %v645
        %v720 = vpop.f32.mrf.mxu0
        %v721 = vadd.f32 %v668, %v720
        %722 = vmatmul.f32.gmra.mxu0 %v646
        %v723 = vpop.f32.mrf.mxu0
        %v724 = vadd.f32 %v668, %v723
        %725 = vmatmul.f32.gmra.mxu0 %v647
        %v726 = vpop.f32.mrf.mxu0
        %v727 = vadd.f32 %v668, %v726
        %728 = vmatmul.f32.gmra.mxu0 %v648
        %v729 = vpop.f32.mrf.mxu0
        %v730 = vadd.f32 %v668, %v729
        %731 = vmatmul.f32.gmra.mxu0 %v649
        %v732 = vpop.f32.mrf.mxu0
        %v733 = vadd.f32 %v668, %v732
        %734 = vdwg.mxu0
        %735 = vst [vmem:[%s348] sm:$0xff] %v688
        %736 = vst [vmem:[%s348 + $0x8] sm:$0xff] %v691
        %737 = vst [vmem:[%s348 + $0x10] sm:$0xff] %v694
        %738 = vst [vmem:[%s348 + $0x18] sm:$0xff] %v697
        %739 = vst [vmem:[%s348 + $0x20] sm:$0xff] %v700
        %740 = vst [vmem:[%s348 + $0x28] sm:$0xff] %v703
        %741 = vst [vmem:[%s348 + $0x30] sm:$0xff] %v706
        %742 = vst [vmem:[%s348 + $0x38] sm:$0xff] %v709
        %743 = vst [vmem:[%s348 + $0x40] sm:$0xff] %v712
        %744 = vst [vmem:[%s348 + $0x48] sm:$0xff] %v715
        %745 = vst [vmem:[%s348 + $0x50] sm:$0xff] %v718
        %746 = vst [vmem:[%s348 + $0x58] sm:$0xff] %v721
        %747 = vst [vmem:[%s348 + $0x60] sm:$0xff] %v724
        %748 = vst [vmem:[%s348 + $0x68] sm:$0xff] %v727
        %749 = vst [vmem:[%s348 + $0x70] sm:$0xff] %v730
        %750 = vst [vmem:[%s348 + $0x78] sm:$0xff] %v733
        %s751 = sand.u32 %s186, 1
        %s752 = scalar_lea.sflag [#allocation4], %s751
        %s753 = sand.u32 %s186, 1
        %s754 = smul.addr %s753, 128
        %s755 = scalar_lea.vmem [#allocation10], %s754
        // Predicated region
        $region65: #{tpu_custom_call.1} parent=47 // pred_check
          %p756 = pneg %p196
        $region66: #{tpu_custom_call.1} parent=47 // pred_check_branch
          %758 = sbr.rel (%p756) target = $region68
        $region67: #{tpu_custom_call.1} parent=47 // pred_region
          %s759 = smul.u32 16, %s26
          %761 = vsyncadd %s752, 0
          %s762 = smul.addr %s759, 8
          %s763 = scalar_lea.hbm %s7, %s762
          %s764 = sshll.u32 %s755, 4
          %s765 = int_to_ptr.vmem [resolvable:$true] %s764
          %s766 = sshll.u32 %s763, 4
          %s767 = int_to_ptr.hbm [resolvable:$true] %s766
          %772 = dma.vmem_to_hbm [thread:$0]  %s765, 2048, %s767, %s752, 128, 128, 8
        $region68: #{tpu_custom_call.1} parent=47 // pred_fallthru
          _
      $region48: #{tpu_custom_call.1} parent=5 // pred_fallthru
        _
      %p773 = scmp.le.s32.totalorder 2, %s21
      // Predicated region
      $region69: #{tpu_custom_call.1} parent=5 // pred_check
        %p774 = pneg %p773
      $region70: #{tpu_custom_call.1} parent=5 // pred_check_branch
        %776 = sbr.rel (%p774) target = $region72
      $region71: #{tpu_custom_call.1} parent=5 // pred_region
        %s777 = ssub.s32 %s21, 2
        // Predicated region
        $region73: #{tpu_custom_call.1} parent=71 // pred_check
          %p778 = pneg %p202
        $region74: #{tpu_custom_call.1} parent=71 // pred_check_branch
          %780 = sbr.rel (%p778) target = $region76
        $region75: #{tpu_custom_call.1} parent=71 // pred_region
          %s781 = sand.u32 %s187, 1
          %s782 = scalar_lea.sflag [#allocation4], %s781
          %s783 = sand.u32 %s187, 1
          %s784 = smul.addr %s783, 128
          %s785 = scalar_lea.vmem [#allocation10], %s784
          %787 = dma.done %s782, 2048
        $region76: #{tpu_custom_call.1} parent=71 // pred_fallthru
          _
      $region72: #{tpu_custom_call.1} parent=5 // pred_fallthru
        _
    $region6: #{tpu_custom_call.1} parent=1 // loop_footer
      %s25 = sadd.s32 1, %s21
    $region7: #{tpu_custom_call.1} parent=1 // loop_footer_branch
      %20 = sbr.rel target = $region3
    $region8: #{tpu_custom_call.1} parent=1 // loop_exit
      _
    %788 = vsyncpa [#allocation3], 1
    %s789 = scalar_lea.sflag [#allocation3], 1
    %790 = vsyncpa %s789, 1
    %791 = vsyncpa [#allocation6], 1
    %792 = vsyncpa [#allocation9], 1
    %793 = vsyncpa [#allocation4], 1
    %s794 = scalar_lea.sflag [#allocation4], 1
    %795 = vsyncpa %s794, 1

</llo_original>
